<compile_context>
chip_gen: v7x
topology: tpu7x:2x2x1
jax: 0.10.0
libtpu: 0.0.40
codegen_flags: <defaults>
</compile_context>

<pallas_src>
import jax
import jax.numpy as jnp
from jax.experimental import pallas as pl
from jax.experimental.pallas import tpu as pltpu


def _round_up(x: int, m: int) -> int:
    return (x + m - 1) // m * m


def linear_kernel(x_ref, w_ref, b_ref, o_ref):
    # bf16 x bf16 -> f32 accumulate on the MXU, bias broadcast-add on the VPU.
    acc = jnp.dot(x_ref[...], w_ref[...], preferred_element_type=jnp.float32)
    o_ref[...] = (acc + b_ref[...]).astype(o_ref.dtype)


def logistic_regression_forward(x, w, b, *, block_batch: int = 512):
    """y = x @ w + b  (equivalent to torch.nn.Linear(input_dim, output_dim)).

    x: [batch, input_dim] float32 (or bf16)
    w: [input_dim, output_dim]   (transposed vs. PyTorch's [out, in])
    b: [output_dim]
    Returns float32 logits [batch, output_dim].
    """
    batch, input_dim = x.shape
    k_w, output_dim = w.shape
    assert input_dim == k_w, (input_dim, k_w)

    # Lane/sublane-aligned padded sizes.
    k_pad = _round_up(input_dim, 128)     # 300 -> 384
    n_pad = _round_up(output_dim, 128)    # 16  -> 128

    # Batch tile: multiple of 8 sublanes, capped at block_batch rows.
    tb = min(block_batch, _round_up(batch, 8))
    b_pad = _round_up(batch, tb)

    # Zero-pad + cast inputs (zeros do not perturb the K-sum).
    x_p = jnp.zeros((b_pad, k_pad), jnp.bfloat16)
    x_p = x_p.at[:batch, :input_dim].set(x.astype(jnp.bfloat16))
    w_p = jnp.zeros((k_pad, n_pad), jnp.bfloat16)
    w_p = w_p.at[:input_dim, :output_dim].set(w.astype(jnp.bfloat16))
    b_p = jnp.zeros((1, n_pad), jnp.float32)
    b_p = b_p.at[0, :output_dim].set(b.astype(jnp.float32))

    grid = (b_pad // tb,)

    out = pl.pallas_call(
        linear_kernel,
        out_shape=jax.ShapeDtypeStruct((b_pad, n_pad), jnp.float32),
        grid=grid,
        in_specs=[
            # x: batch-tiled, streamed/double-buffered across grid steps.
            pl.BlockSpec((tb, k_pad), lambda i: (i, 0)),
            # w, b: constant index maps -> stay VMEM-resident.
            pl.BlockSpec((k_pad, n_pad), lambda i: (0, 0)),
            pl.BlockSpec((1, n_pad), lambda i: (0, 0)),
        ],
        out_specs=pl.BlockSpec((tb, n_pad), lambda i: (i, 0)),
        compiler_params=pltpu.CompilerParams(
            dimension_semantics=("parallel",),
        ),
    )(x_p, w_p, b_p)

    return out[:batch, :output_dim]


def _reference_bf16(x, w, b):
    """Reference with the same bf16-input / f32-accumulate math."""
    return (
        jnp.dot(
            x.astype(jnp.bfloat16),
            w.astype(jnp.bfloat16),
            preferred_element_type=jnp.float32,
        )
        + b.astype(jnp.float32)
    )


if __name__ == "__main__":
    # Module semantics: LogisticRegression(input_dim=300, output_dim=num_labels).
    input_dim = 300
    output_dim = 16   # stand-in for num_labels
    batch = 8

    key = jax.random.PRNGKey(0)
    kx, kw, kb = jax.random.split(key, 3)

    x = jax.random.normal(kx, (batch, input_dim), dtype=jnp.float32)
    # Deterministic init mimicking nn.Linear's uniform(-1/sqrt(in), 1/sqrt(in)).
    bound = 1.0 / jnp.sqrt(jnp.float32(input_dim))
    w = jax.random.uniform(kw, (input_dim, output_dim), dtype=jnp.float32,
                           minval=-bound, maxval=bound)
    b = jax.random.uniform(kb, (output_dim,), dtype=jnp.float32,
                           minval=-bound, maxval=bound)

    fwd = jax.jit(logistic_regression_forward)

    # Small (spec-sized) run.
    y = fwd(x, w, b)
    jax.block_until_ready(y)
    assert y.shape == (batch, output_dim)
    y_ref_bf16 = _reference_bf16(x, w, b)
    y_ref_f32 = x @ w + b
    assert jnp.allclose(y, y_ref_bf16, atol=1e-4, rtol=1e-4)
    assert jnp.allclose(y, y_ref_f32, atol=5e-2, rtol=5e-2)

    # Larger batch to exercise the tiled / pipelined path (grid > 1).
    big_batch = 1024
    xb = jax.random.normal(jax.random.PRNGKey(1), (big_batch, input_dim),
                           dtype=jnp.float32)
    yb = fwd(xb, w, b)
    jax.block_until_ready(yb)
    assert yb.shape == (big_batch, output_dim)
    assert jnp.allclose(yb, _reference_bf16(xb, w, b), atol=1e-4, rtol=1e-4)

    print("KERNEL_OK")
</pallas_src>

<mosaic_0001>
module attributes {stable_mosaic.version = 11 : i64} {
  func.func @linear_kernel(%arg0: i32, %arg1: memref<8x384xbf16, #tpu.memory_space<vmem>>, %arg2: memref<384x128xbf16, #tpu.memory_space<vmem>>, %arg3: memref<1x128xf32, #tpu.memory_space<vmem>>, %arg4: memref<8x128xf32, #tpu.memory_space<vmem>>) attributes {dimension_semantics = [#tpu.dimension_semantics<parallel>], iteration_bounds = array<i64: 1>, scalar_prefetch = 0 : i64, scratch_operands = 0 : i64, tpu.core_type = #tpu.core_type<tc>, window_params = [{transform_indices = @transform_0, window_bounds = array<i64: 8, 384>}, {pipeline_mode = #tpu.pipeline_mode<synchronous>, transform_indices = @transform_1, window_bounds = array<i64: 384, 128>}, {pipeline_mode = #tpu.pipeline_mode<synchronous>, transform_indices = @transform_2, window_bounds = array<i64: 1, 128>}, {transform_indices = @transform_3, window_bounds = array<i64: 8, 128>}]} {
    %c0 = arith.constant 0 : index
    %c0_0 = arith.constant 0 : index
    %0 = vector.load %arg1[%c0, %c0_0] : memref<8x384xbf16, #tpu.memory_space<vmem>>, vector<8x384xbf16>
    %c0_1 = arith.constant 0 : index
    %c0_2 = arith.constant 0 : index
    %1 = vector.load %arg2[%c0_1, %c0_2] : memref<384x128xbf16, #tpu.memory_space<vmem>>, vector<384x128xbf16>
    %cst = arith.constant dense<0.000000e+00> : vector<8x128xf32>
    %2 = tpu.matmul %0, %1, %cst {dimension_numbers = #tpu.dot_dimension_numbers<[1], [0], [0], [1], [0, 0, 1, 1], [], []>} : vector<8x384xbf16>, vector<384x128xbf16>, vector<8x128xf32> -> vector<8x128xf32>
    %c0_3 = arith.constant 0 : index
    %c0_4 = arith.constant 0 : index
    %3 = vector.load %arg3[%c0_3, %c0_4] : memref<1x128xf32, #tpu.memory_space<vmem>>, vector<1x128xf32>
    %4 = vector.broadcast %3 : vector<1x128xf32> to vector<8x128xf32>
    %5 = arith.addf %2, %4 : vector<8x128xf32>
    %c0_5 = arith.constant 0 : index
    %c0_6 = arith.constant 0 : index
    %6 = vector.load %arg4[%c0_5, %c0_6] : memref<8x128xf32, #tpu.memory_space<vmem>>, vector<8x128xf32>
    tpu.vector_store %arg4[%c0_5, %c0_6], %5 {strides = array<i32>} : memref<8x128xf32, #tpu.memory_space<vmem>>, vector<8x128xf32>,
    return
  }
  func.func @transform_0(%arg0: i32) -> (i32, i32) {
    %c0_i32 = arith.constant 0 : i32
    %c0_i32_0 = arith.constant 0 : i32
    return %arg0, %c0_i32 : i32, i32
  }
  func.func @transform_1(%arg0: i32) -> (i32, i32) {
    %c0_i32 = arith.constant 0 : i32
    %c0_i32_0 = arith.constant 0 : i32
    %c0_i32_1 = arith.constant 0 : i32
    return %c0_i32, %c0_i32_0 : i32, i32
  }
  func.func @transform_2(%arg0: i32) -> (i32, i32) {
    %c0_i32 = arith.constant 0 : i32
    %c0_i32_0 = arith.constant 0 : i32
    %c0_i32_1 = arith.constant 0 : i32
    return %c0_i32, %c0_i32_0 : i32, i32
  }
  func.func @transform_3(%arg0: i32) -> (i32, i32) {
    %c0_i32 = arith.constant 0 : i32
    %c0_i32_0 = arith.constant 0 : i32
    return %arg0, %c0_i32 : i32, i32
  }
}

</mosaic_0001>

<llo_original>
// kernel: logistic_regression_forward.1
$region0: #{logistic_regression_forward.1}
  #allocation0 [shape = 'u32[]', space=smem, size = 0x4, offset = 0x4, fixed_abs, tag = 'smem constant byte address 0x4 - core index']
  #allocation1 [shape = 'u32[144,128]{1,0:T(1,128)}', space=vmem, size = 0x12000, scoped, tag = 'internal scratch']
  %s0 = inlined_call_operand.vmem [shape: bf16[8,384], index: 0, kind: input, shape index: {}]
  %s1 = inlined_call_operand.vmem [shape: bf16[384,128], index: 1, kind: input, shape index: {}]
  %s2 = inlined_call_operand.vmem [shape: f32[1,128], index: 2, kind: input, shape index: {}]
  %s3 = inlined_call_operand.hbm [shape: f32[8,128], index: 3, kind: output, shape index: {}]
  %s4 = sld [smem:[#allocation0]]
  $region22: #{logistic_regression_forward.1} parent=0
    _
  %s6 = ssub.s32 1, %s4
  %s7 = scalar_select 0, %s6, %s4
  $region1: #{logistic_regression_forward.1} parent=0
    #allocation2 [shape = 'u8[4096]{0}', space=vmem, size = 0x1000, scoped, tag = 'output window, operand 0, single buffered']
    #allocation3 [shape = 's32[1]{0}', space=sflag, size = 0x4, scoped, tag = 'scoped memory for logistic_regression_forward.1']
    %8 = vsyncpa [#allocation3], 0
    // Predicated region
    $region2: #{logistic_regression_forward.1} parent=1 // pred_check
      _
    $region3: #{logistic_regression_forward.1} parent=1 // pred_check_branch
      %10 = sbr.rel (0) target = $region5
    $region4: #{logistic_regression_forward.1} parent=1 // pred_region
      _
    $region5: #{logistic_regression_forward.1} parent=1 // pred_fallthru
      _
    // Predicated region
    $region6: #{logistic_regression_forward.1} parent=1 // pred_check
      _
    $region7: #{logistic_regression_forward.1} parent=1 // pred_check_branch
      %12 = sbr.rel (0) target = $region9
    $region8: #{logistic_regression_forward.1} parent=1 // pred_region
      _
    $region9: #{logistic_regression_forward.1} parent=1 // pred_fallthru
      _
    // Predicated region
    $region10: #{logistic_regression_forward.1} parent=1 // pred_check
      _
    $region11: #{logistic_regression_forward.1} parent=1 // pred_check_branch
      %14 = sbr.rel (0) target = $region13
    $region12: #{logistic_regression_forward.1} parent=1 // pred_region
      _
    $region13: #{logistic_regression_forward.1} parent=1 // pred_fallthru
      _
    %v16 = vld [vmem:[%s0] sm:$0xff]
    %v17 = vld [vmem:[%s0 + $0x8] sm:$0xf]
    %v18 = vld [vmem:[%s1] sm:$0xf]
    %v19 = vld [vmem:[%s1 + $0x4] sm:$0xf]
    %v20 = vld [vmem:[%s1 + $0x8] sm:$0xf]
    %v21 = vld [vmem:[%s1 + $0xc] sm:$0xf]
    %v22 = vld [vmem:[%s1 + $0x10] sm:$0xf]
    %v23 = vld [vmem:[%s1 + $0x14] sm:$0xf]
    %v24 = vld [vmem:[%s1 + $0x18] sm:$0xf]
    %v25 = vld [vmem:[%s1 + $0x1c] sm:$0xf]
    %v26 = vld [vmem:[%s1 + $0x20] sm:$0xf]
    %v27 = vld [vmem:[%s1 + $0x24] sm:$0xf]
    %v28 = vld [vmem:[%s1 + $0x28] sm:$0xf]
    %v29 = vld [vmem:[%s1 + $0x2c] sm:$0xf]
    %v30 = vld [vmem:[%s1 + $0x30] sm:$0xf]
    %v31 = vld [vmem:[%s1 + $0x34] sm:$0xf]
    %v32 = vld [vmem:[%s1 + $0x38] sm:$0xf]
    %v33 = vld [vmem:[%s1 + $0x3c] sm:$0xf]
    %v34 = vld [vmem:[%s1 + $0x40] sm:$0xf]
    %v35 = vld [vmem:[%s1 + $0x44] sm:$0xf]
    %v36 = vld [vmem:[%s1 + $0x48] sm:$0xf]
    %v37 = vld [vmem:[%s1 + $0x4c] sm:$0xf]
    %v38 = vld [vmem:[%s1 + $0x50] sm:$0xf]
    %v39 = vld [vmem:[%s1 + $0x54] sm:$0xf]
    %v40 = vld [vmem:[%s1 + $0x58] sm:$0xf]
    %v41 = vld [vmem:[%s1 + $0x5c] sm:$0xf]
    %v42 = vld [vmem:[%s1 + $0x60] sm:$0xf]
    %v43 = vld [vmem:[%s1 + $0x64] sm:$0xf]
    %v44 = vld [vmem:[%s1 + $0x68] sm:$0xf]
    %v45 = vld [vmem:[%s1 + $0x6c] sm:$0xf]
    %v46 = vld [vmem:[%s1 + $0x70] sm:$0xf]
    %v47 = vld [vmem:[%s1 + $0x74] sm:$0xf]
    %v48 = vld [vmem:[%s1 + $0x78] sm:$0xf]
    %v49 = vld [vmem:[%s1 + $0x7c] sm:$0xf]
    %v50 = vld [vmem:[%s1 + $0x80] sm:$0xf]
    %v51 = vld [vmem:[%s1 + $0x84] sm:$0xf]
    %v52 = vld [vmem:[%s1 + $0x88] sm:$0xf]
    %v53 = vld [vmem:[%s1 + $0x8c] sm:$0xf]
    %v54 = vld [vmem:[%s1 + $0x90] sm:$0xf]
    %v55 = vld [vmem:[%s1 + $0x94] sm:$0xf]
    %v56 = vld [vmem:[%s1 + $0x98] sm:$0xf]
    %v57 = vld [vmem:[%s1 + $0x9c] sm:$0xf]
    %v58 = vld [vmem:[%s1 + $0xa0] sm:$0xf]
    %v59 = vld [vmem:[%s1 + $0xa4] sm:$0xf]
    %v60 = vld [vmem:[%s1 + $0xa8] sm:$0xf]
    %v61 = vld [vmem:[%s1 + $0xac] sm:$0xf]
    %v62 = vld [vmem:[%s1 + $0xb0] sm:$0xf]
    %v63 = vld [vmem:[%s1 + $0xb4] sm:$0xf]
    %v64 = vld [vmem:[%s1 + $0xb8] sm:$0xf]
    %v65 = vld [vmem:[%s1 + $0xbc] sm:$0xf]
    %v66 = vld [vmem:[%s2] sm:$0x1]
    %v68 = vlaneseq
    %v69 = vshrl.u32 %v68, 7
    %v70 = vsub.s32 0, %v69
    %v71 = vrot.slane %v66, %v70
    %v75 = vunpack.c.l.b16 %v16
    %v76 = vunpack.c.h.b16 %v16
    %v77 = vunpack.c.l.b16 %v17
    %v78 = vpack.c.b16 %v75, %v75
    %v79 = vpack.c.b16 %v76, %v76
    %v80 = vpack.c.b16 %v77, %v77
    %v132 = vunpack.c.l.b16 %v18
    %v133 = vunpack.c.l.b16 %v19
    %v134 = vunpack.c.l.b16 %v20
    %v135 = vunpack.c.l.b16 %v21
    %v136 = vunpack.c.l.b16 %v22
    %v137 = vunpack.c.l.b16 %v23
    %v138 = vunpack.c.l.b16 %v24
    %v139 = vunpack.c.l.b16 %v25
    %v140 = vunpack.c.l.b16 %v26
    %v141 = vunpack.c.l.b16 %v27
    %v142 = vunpack.c.l.b16 %v28
    %v143 = vunpack.c.l.b16 %v29
    %v144 = vunpack.c.l.b16 %v30
    %v145 = vunpack.c.l.b16 %v31
    %v146 = vunpack.c.l.b16 %v32
    %v147 = vunpack.c.l.b16 %v33
    %v148 = vunpack.c.l.b16 %v34
    %v149 = vunpack.c.l.b16 %v35
    %v150 = vunpack.c.l.b16 %v36
    %v151 = vunpack.c.l.b16 %v37
    %v152 = vunpack.c.l.b16 %v38
    %v153 = vunpack.c.l.b16 %v39
    %v154 = vunpack.c.l.b16 %v40
    %v155 = vunpack.c.l.b16 %v41
    %v156 = vunpack.c.l.b16 %v42
    %v157 = vunpack.c.l.b16 %v43
    %v158 = vunpack.c.l.b16 %v44
    %v159 = vunpack.c.l.b16 %v45
    %v160 = vunpack.c.l.b16 %v46
    %v161 = vunpack.c.l.b16 %v47
    %v162 = vunpack.c.l.b16 %v48
    %v163 = vunpack.c.l.b16 %v49
    %v164 = vunpack.c.l.b16 %v50
    %v165 = vunpack.c.l.b16 %v51
    %v166 = vunpack.c.l.b16 %v52
    %v167 = vunpack.c.l.b16 %v53
    %v168 = vunpack.c.l.b16 %v54
    %v169 = vunpack.c.l.b16 %v55
    %v170 = vunpack.c.l.b16 %v56
    %v171 = vunpack.c.l.b16 %v57
    %v172 = vunpack.c.l.b16 %v58
    %v173 = vunpack.c.l.b16 %v59
    %v174 = vunpack.c.l.b16 %v60
    %v175 = vunpack.c.l.b16 %v61
    %v176 = vunpack.c.l.b16 %v62
    %v177 = vunpack.c.l.b16 %v63
    %v178 = vunpack.c.l.b16 %v64
    %v179 = vunpack.c.l.b16 %v65
    %v180 = vpack.c.b16 %v133, %v132
    %v181 = vpack.c.b16 %v135, %v134
    %v182 = vpack.c.b16 %v137, %v136
    %v183 = vpack.c.b16 %v139, %v138
    %v184 = vpack.c.b16 %v141, %v140
    %v185 = vpack.c.b16 %v143, %v142
    %v186 = vpack.c.b16 %v145, %v144
    %v187 = vpack.c.b16 %v147, %v146
    %v188 = vpack.c.b16 %v149, %v148
    %v189 = vpack.c.b16 %v151, %v150
    %v190 = vpack.c.b16 %v153, %v152
    %v191 = vpack.c.b16 %v155, %v154
    %v192 = vpack.c.b16 %v157, %v156
    %v193 = vpack.c.b16 %v159, %v158
    %v194 = vpack.c.b16 %v161, %v160
    %v195 = vpack.c.b16 %v163, %v162
    %v196 = vpack.c.b16 %v165, %v164
    %v197 = vpack.c.b16 %v167, %v166
    %v198 = vpack.c.b16 %v169, %v168
    %v199 = vpack.c.b16 %v171, %v170
    %v200 = vpack.c.b16 %v173, %v172
    %v201 = vpack.c.b16 %v175, %v174
    %v202 = vpack.c.b16 %v177, %v176
    %v203 = vpack.c.b16 %v179, %v178
    %228 = vmatprep.subr.bf16.mxu0 0
    %229 = vmatpush1.bf16.msra.mxu0 %v180
    %230 = vmatprep.subr.bf16.mxu0 0
    %231 = vmatpush1.bf16.msra.mxu0 %v181
    %232 = vmatprep.subr.bf16.mxu0 0
    %233 = vmatpush1.bf16.msra.mxu0 %v182
    %234 = vmatprep.subr.bf16.mxu0 0
    %235 = vmatpush1.bf16.msra.mxu0 %v183
    %236 = vmatprep.subr.bf16.mxu0 0
    %237 = vmatpush1.bf16.msra.mxu0 %v184
    %238 = vmatprep.subr.bf16.mxu0 0
    %239 = vmatpush1.bf16.msra.mxu0 %v185
    %240 = vmatprep.subr.bf16.mxu0 0
    %241 = vmatpush1.bf16.msra.mxu0 %v186
    %242 = vmatprep.subr.bf16.mxu0 0
    %243 = vmatpush1.bf16.msra.mxu0 %v187
    %244 = vmatprep.subr.bf16.mxu0 0
    %245 = vmatpush1.bf16.msra.mxu0 %v188
    %246 = vmatprep.subr.bf16.mxu0 0
    %247 = vmatpush1.bf16.msra.mxu0 %v189
    %248 = vmatprep.subr.bf16.mxu0 0
    %249 = vmatpush1.bf16.msra.mxu0 %v190
    %250 = vmatprep.subr.bf16.mxu0 0
    %251 = vmatpush1.bf16.msra.mxu0 %v191
    %252 = vmatprep.subr.bf16.mxu0 0
    %253 = vmatpush1.bf16.msra.mxu0 %v192
    %254 = vmatprep.subr.bf16.mxu0 0
    %255 = vmatpush1.bf16.msra.mxu0 %v193
    %256 = vmatprep.subr.bf16.mxu0 0
    %257 = vmatpush1.bf16.msra.mxu0 %v194
    %258 = vmatprep.subr.bf16.mxu0 0
    %259 = vmatpush1.bf16.msra.mxu0 %v195
    %260 = vmatprep.mubr.bf16.mxu0 %v79
    %261 = vmatmul.mubr.bf16.gmra.mrb[0].mxu0 %v78
    %v262 = vpop.f32.mrb[0].mxu0
    %v263 = vadd.f32 %v71, %v262
    %v264 = vpop.f32.mrb[0].mxu0
    %v265 = vpop.f32.mrb[0].mxu0
    %v266 = vpop.f32.mrb[0].mxu0
    %267 = vdwg.mxu0
    %268 = vmatprep.subr.bf16.mxu0 0
    %269 = vmatpush1.bf16.msra.mxu0 %v196
    %270 = vmatprep.subr.bf16.mxu0 0
    %271 = vmatpush1.bf16.msra.mxu0 %v197
    %272 = vmatprep.subr.bf16.mxu0 0
    %273 = vmatpush1.bf16.msra.mxu0 %v198
    %274 = vmatprep.subr.bf16.mxu0 0
    %275 = vmatpush1.bf16.msra.mxu0 %v199
    %276 = vmatprep.subr.bf16.mxu0 0
    %277 = vmatpush1.bf16.msra.mxu0 %v200
    %278 = vmatprep.subr.bf16.mxu0 0
    %279 = vmatpush1.bf16.msra.mxu0 %v201
    %280 = vmatprep.subr.bf16.mxu0 0
    %281 = vmatpush1.bf16.msra.mxu0 %v202
    %282 = vmatprep.subr.bf16.mxu0 0
    %283 = vmatpush1.bf16.msra.mxu0 %v203
    %284 = vmatprep.subr.bf16.mxu0 0
    %285 = vmatpush1.bf16.msra.mxu0 0
    %286 = vmatprep.subr.bf16.mxu0 0
    %287 = vmatpush1.bf16.msra.mxu0 0
    %288 = vmatprep.subr.bf16.mxu0 0
    %289 = vmatpush1.bf16.msra.mxu0 0
    %290 = vmatprep.subr.bf16.mxu0 0
    %291 = vmatpush1.bf16.msra.mxu0 0
    %292 = vmatprep.subr.bf16.mxu0 0
    %293 = vmatpush1.bf16.msra.mxu0 0
    %294 = vmatprep.subr.bf16.mxu0 0
    %295 = vmatpush1.bf16.msra.mxu0 0
    %296 = vmatprep.subr.bf16.mxu0 0
    %297 = vmatpush1.bf16.msra.mxu0 0
    %298 = vmatprep.subr.bf16.mxu0 0
    %299 = vmatpush1.bf16.msra.mxu0 0
    %300 = vmatprep.mubr.bf16.mxu0 0
    %301 = vmatmul.mubr.bf16.gmra.mrb[0].mxu0 %v80
    %v302 = vpop.f32.mrb[0].mxu0
    %v303 = vadd.f32 %v263, %v302
    %v304 = vpop.f32.mrb[0].mxu0
    %v305 = vpop.f32.mrb[0].mxu0
    %v306 = vpop.f32.mrb[0].mxu0
    %307 = vdwg.mxu0
    %308 = vst [vmem:[#allocation2] sm:$0xff] %v303
    // Predicated region
    $region14: #{logistic_regression_forward.1} parent=1 // pred_check
      _
    $region15: #{logistic_regression_forward.1} parent=1 // pred_check_branch
      %310 = sbr.rel (0) target = $region17
    $region16: #{logistic_regression_forward.1} parent=1 // pred_region
      %s312 = ssub.s32 128, 128
      %313 = vsyncadd [#allocation3], %s312
      %s315 = sshll.u32 [#allocation2], 4
      %s316 = int_to_ptr.vmem [resolvable:$true] %s315
      %318 = dma.vmem_to_hbm [thread:$0]  %s316, 128, %s3, [#allocation3]
    $region17: #{logistic_regression_forward.1} parent=1 // pred_fallthru
      _
    // Predicated region
    $region18: #{logistic_regression_forward.1} parent=1 // pred_check
      _
    $region19: #{logistic_regression_forward.1} parent=1 // pred_check_branch
      %320 = sbr.rel (0) target = $region21
    $region20: #{logistic_regression_forward.1} parent=1 // pred_region
      %321 = dma.done [#allocation3], 128
    $region21: #{logistic_regression_forward.1} parent=1 // pred_fallthru
      _
    %322 = vsyncpa [#allocation3], 1

</llo_original>
